<compile_context>
chip_gen: v7x
topology: tpu7x:2x2x1
jax: 0.10.0
libtpu: 0.0.40
codegen_flags: <defaults>
</compile_context>

<pallas_src>
import jax
import jax.numpy as jnp
import numpy as np
from jax.experimental import pallas as pl
from jax.experimental.pallas import tpu as pltpu

# TODO(synk): `original_model` is arbitrary in the PyTorch spec; a synthetic
# Conv3x3(pad=1)+bias -> ReLU -> AdaptiveAvgPool2d(1) backbone (classifier dropped)
# is instantiated here so the forward pass has a concrete shape.

_LANES = 128       # TPU lane width; pooled output padded to this for dense stores.
_BATCH_CHUNK = 8   # images per grid step -> M = chunk*H = 128 rows per MXU dot and an
                   # (8, 128) unmasked output store. Raise to 16 (M=256) to fill the
                   # 256-wide MXU on v6e/v7x when the real batch is large enough.


def _fused_conv_relu_gap_kernel(x_ref, w_ref, b_ref, p_ref, o_ref):
    """Per-chunk conv3x3(pad=1) + bias + ReLU + global-average-pool.

    x_ref: (BN, H, Kpad)    bf16  vertical-im2col'd, lane-padded input rows
    w_ref: (Kpad, W*Cout)   bf16  banded conv weight (vertical taps folded into K)
    b_ref: (1, W*Cout)      f32   bias tiled per output column
    p_ref: (W*Cout, 128)    bf16  column-folding pooling matrix (x 1/(H*W))
    o_ref: (BN, 128)        f32   pooled features (first Cout lanes valid)
    """
    bn, h, kpad = x_ref.shape
    wcout = w_ref.shape[1]

    # Convolution: one bf16 MXU dot with f32 accumulation (M = bn*h, K = kpad).
    lhs = x_ref[...].reshape(bn * h, kpad)
    acc = jnp.dot(lhs, w_ref[...], preferred_element_type=jnp.float32)

    # Bias + ReLU in f32 on the VPU.
    acc = jnp.maximum(acc + b_ref[...], 0.0)

    # GAP step 1: per-image sum over the H rows (in-block XLU/VPU reduction; no
    # cross-image straddle rows exist because each image was im2col'd separately).
    pooled = jnp.sum(acc.reshape(bn, h, wcout), axis=1)            # (bn, W*Cout) f32

    # GAP step 2: fold the W column groups onto Cout lanes and apply 1/(H*W);
    # small bf16 MXU dot, f32 accumulation, lane-dense (bn, 128) store.
    o_ref[...] = jnp.dot(pooled.astype(jnp.bfloat16), p_ref[...],
                         preferred_element_type=jnp.float32)


@jax.jit
def feature_extractor_forward(x_nchw, w_oihw, b):
    """FeatureExtractor forward: conv3x3(pad=1) -> ReLU -> GAP -> flatten."""
    N, Cin, H, W = x_nchw.shape
    Cout, _, KH, KW = w_oihw.shape
    assert (KH, KW) == (3, 3) and Cout <= _LANES
    Hp, Wp = H + 2, W + 2
    k_raw = KH * Wp * Cin                                   # 3 vertical taps folded into K
    k_pad = ((k_raw + _LANES - 1) // _LANES) * _LANES       # lane-pad K (216 -> 256)
    wcout = W * Cout
    bn = _BATCH_CHUNK
    n_pad = ((N + bn - 1) // bn) * bn

    # ---- glue: NCHW -> NHWC -> spatial pad -> vertical-only im2col -> bf16 ----
    x_nhwc = jnp.transpose(x_nchw, (0, 2, 3, 1)).astype(jnp.float32)
    x_sp = jnp.pad(x_nhwc, ((0, 0), (1, 1), (1, 1), (0, 0)))        # (N, Hp, Wp, Cin)
    xv = jnp.stack([x_sp[:, dy:dy + H] for dy in range(KH)], axis=2)  # (N, H, 3, Wp, Cin)
    x3d = xv.reshape(N, H, k_raw)
    x3d = jnp.pad(x3d, ((0, n_pad - N), (0, 0), (0, k_pad - k_raw))
                  ).astype(jnp.bfloat16)                            # (n_pad, H, k_pad) bf16

    # ---- banded conv weight with vertical taps folded into K:
    #      w_band[dy*Wp*Cin + (xw+dx)*Cin + ci, xw*Cout + co] = w[co, ci, dy, dx]
    w_taps = jnp.transpose(w_oihw, (2, 3, 1, 0)).astype(jnp.float32)  # (3,3,Cin,Cout)
    shift = np.zeros((KW, Wp, W), np.float32)
    for dx in range(KW):
        for xw in range(W):
            shift[dx, xw + dx, xw] = 1.0
    w_band = jnp.einsum("yxio,xpw->ypiwo", w_taps, jnp.asarray(shift))
    w_band = w_band.reshape(k_raw, wcout)
    w_band = jnp.pad(w_band, ((0, k_pad - k_raw), (0, 0))).astype(jnp.bfloat16)

    # bias tiled over output columns (f32, used on the VPU)
    b_tile = jnp.tile(b.astype(jnp.float32), W).reshape(1, wcout)

    # column-folding pooling matrix (0 / 1/(H*W) values -> exact in bf16)
    p_np = np.zeros((wcout, _LANES), np.float32)
    inv_hw = 1.0 / float(H * W)
    for xw in range(W):
        for co in range(Cout):
            p_np[xw * Cout + co, co] = inv_hw
    p_mat = jnp.asarray(p_np, dtype=jnp.bfloat16)

    out = pl.pallas_call(
        _fused_conv_relu_gap_kernel,
        out_shape=jax.ShapeDtypeStruct((n_pad, _LANES), jnp.float32),
        grid_spec=pltpu.PrefetchScalarGridSpec(
            num_scalar_prefetch=0,
            grid=(n_pad // bn,),
            in_specs=[
                pl.BlockSpec((bn, H, k_pad), lambda i: (i, 0, 0)),   # per-chunk input
                pl.BlockSpec((k_pad, wcout), lambda i: (0, 0)),      # weights (resident)
                pl.BlockSpec((1, wcout), lambda i: (0, 0)),          # bias
                pl.BlockSpec((wcout, _LANES), lambda i: (0, 0)),     # pooling fold
            ],
            out_specs=pl.BlockSpec((bn, _LANES), lambda i: (i, 0)),
        ),
        compiler_params=pltpu.CompilerParams(
            dimension_semantics=("parallel",),          # batch chunks -> v7x dual TCs
            vmem_limit_bytes=32 * 1024 * 1024,          # explicit budget (usage << this)
        ),
    )(x3d, w_band, b_tile, p_mat)

    # x.view(x.size(0), -1): drop batch / lane padding -> (N, Cout)
    return out[:N, :Cout]


def _reference_forward(x_nchw, w_oihw, b):
    """Pure-JAX reference matching the PyTorch module semantics."""
    y = jax.lax.conv_general_dilated(
        x_nchw.astype(jnp.float32), w_oihw.astype(jnp.float32),
        window_strides=(1, 1), padding="SAME",
        dimension_numbers=("NCHW", "OIHW", "NCHW"))
    y = jnp.maximum(y + b.reshape(1, -1, 1, 1), 0.0)
    y = jnp.mean(y, axis=(2, 3))                 # AdaptiveAvgPool2d(1)
    return y.reshape(y.shape[0], -1)             # flatten


if __name__ == "__main__":
    # Deterministic synthetic parameters / inputs (no checkpoint loading).
    N, Cin, H, W = 2, 4, 16, 16
    Cout = 8
    key = jax.random.PRNGKey(0)
    kx, kw, kb = jax.random.split(key, 3)
    x = jax.random.normal(kx, (N, Cin, H, W), dtype=jnp.float32)
    w = jax.random.normal(kw, (Cout, Cin, 3, 3), dtype=jnp.float32) * 0.1
    b = jax.random.normal(kb, (Cout,), dtype=jnp.float32) * 0.1

    feats = jax.block_until_ready(feature_extractor_forward(x, w, b))
    ref = jax.block_until_ready(_reference_forward(x, w, b))

    assert feats.shape == (N, Cout), feats.shape
    # bf16 matmul operands (f32 accumulation) -> loosened tolerance vs f32 ref.
    np.testing.assert_allclose(np.asarray(feats), np.asarray(ref),
                               rtol=1e-2, atol=1e-2)
    print("KERNEL_OK")
</pallas_src>

<mosaic_0001>
module attributes {stable_mosaic.version = 11 : i64} {
  func.func @_fused_conv_relu_gap_kernel(%arg0: i32, %arg1: memref<8x16x256xbf16, #tpu.memory_space<vmem>>, %arg2: memref<256x128xbf16, #tpu.memory_space<vmem>>, %arg3: memref<1x128xf32, #tpu.memory_space<vmem>>, %arg4: memref<128x128xbf16, #tpu.memory_space<vmem>>, %arg5: memref<8x128xf32, #tpu.memory_space<vmem>>) attributes {dimension_semantics = [#tpu.dimension_semantics<parallel>], iteration_bounds = array<i64: 1>, scalar_prefetch = 0 : i64, scratch_operands = 0 : i64, tpu.core_type = #tpu.core_type<tc>, window_params = [{transform_indices = @transform_0, window_bounds = array<i64: 8, 16, 256>}, {pipeline_mode = #tpu.pipeline_mode<synchronous>, transform_indices = @transform_1, window_bounds = array<i64: 256, 128>}, {pipeline_mode = #tpu.pipeline_mode<synchronous>, transform_indices = @transform_2, window_bounds = array<i64: 1, 128>}, {pipeline_mode = #tpu.pipeline_mode<synchronous>, transform_indices = @transform_3, window_bounds = array<i64: 128, 128>}, {transform_indices = @transform_4, window_bounds = array<i64: 8, 128>}]} {
    %c0 = arith.constant 0 : index
    %c0_0 = arith.constant 0 : index
    %c0_1 = arith.constant 0 : index
    %0 = vector.load %arg1[%c0, %c0_0, %c0_1] : memref<8x16x256xbf16, #tpu.memory_space<vmem>>, vector<8x16x256xbf16>
    %1 = vector.shape_cast %0 : vector<8x16x256xbf16> to vector<128x256xbf16>
    %c0_2 = arith.constant 0 : index
    %c0_3 = arith.constant 0 : index
    %2 = vector.load %arg2[%c0_2, %c0_3] : memref<256x128xbf16, #tpu.memory_space<vmem>>, vector<256x128xbf16>
    %cst = arith.constant dense<0.000000e+00> : vector<128x128xf32>
    %3 = tpu.matmul %1, %2, %cst {dimension_numbers = #tpu.dot_dimension_numbers<[1], [0], [0], [1], [0, 0, 1, 1], [], []>} : vector<128x256xbf16>, vector<256x128xbf16>, vector<128x128xf32> -> vector<128x128xf32>
    %c0_4 = arith.constant 0 : index
    %c0_5 = arith.constant 0 : index
    %4 = vector.load %arg3[%c0_4, %c0_5] : memref<1x128xf32, #tpu.memory_space<vmem>>, vector<1x128xf32>
    %5 = vector.broadcast %4 : vector<1x128xf32> to vector<128x128xf32>
    %6 = arith.addf %3, %5 : vector<128x128xf32>
    %cst_6 = arith.constant 0.000000e+00 : f32
    %7 = vector.broadcast %cst_6 : f32 to vector<128x128xf32>
    %8 = arith.maximumf %6, %7 : vector<128x128xf32>
    %9 = vector.shape_cast %8 : vector<128x128xf32> to vector<8x16x128xf32>
    %cst_7 = arith.constant dense<0.000000e+00> : vector<8x128xf32>
    %10 = vector.multi_reduction <add>, %9, %cst_7 [1] : vector<8x16x128xf32> to vector<8x128xf32>
    %11 = arith.truncf %10 : vector<8x128xf32> to vector<8x128xbf16>
    %c0_8 = arith.constant 0 : index
    %c0_9 = arith.constant 0 : index
    %12 = vector.load %arg4[%c0_8, %c0_9] : memref<128x128xbf16, #tpu.memory_space<vmem>>, vector<128x128xbf16>
    %cst_10 = arith.constant dense<0.000000e+00> : vector<8x128xf32>
    %13 = tpu.matmul %11, %12, %cst_10 {dimension_numbers = #tpu.dot_dimension_numbers<[1], [0], [0], [1], [0, 0, 1, 1], [], []>} : vector<8x128xbf16>, vector<128x128xbf16>, vector<8x128xf32> -> vector<8x128xf32>
    %c0_11 = arith.constant 0 : index
    %c0_12 = arith.constant 0 : index
    %14 = vector.load %arg5[%c0_11, %c0_12] : memref<8x128xf32, #tpu.memory_space<vmem>>, vector<8x128xf32>
    tpu.vector_store %arg5[%c0_11, %c0_12], %13 {strides = array<i32>} : memref<8x128xf32, #tpu.memory_space<vmem>>, vector<8x128xf32>,
    return
  }
  func.func @transform_0(%arg0: i32) -> (i32, i32, i32) {
    %c0_i32 = arith.constant 0 : i32
    %c0_i32_0 = arith.constant 0 : i32
    %c0_i32_1 = arith.constant 0 : i32
    return %arg0, %c0_i32, %c0_i32_0 : i32, i32, i32
  }
  func.func @transform_1(%arg0: i32) -> (i32, i32) {
    %c0_i32 = arith.constant 0 : i32
    %c0_i32_0 = arith.constant 0 : i32
    %c0_i32_1 = arith.constant 0 : i32
    return %c0_i32, %c0_i32_0 : i32, i32
  }
  func.func @transform_2(%arg0: i32) -> (i32, i32) {
    %c0_i32 = arith.constant 0 : i32
    %c0_i32_0 = arith.constant 0 : i32
    %c0_i32_1 = arith.constant 0 : i32
    return %c0_i32, %c0_i32_0 : i32, i32
  }
  func.func @transform_3(%arg0: i32) -> (i32, i32) {
    %c0_i32 = arith.constant 0 : i32
    %c0_i32_0 = arith.constant 0 : i32
    %c0_i32_1 = arith.constant 0 : i32
    return %c0_i32, %c0_i32_0 : i32, i32
  }
  func.func @transform_4(%arg0: i32) -> (i32, i32) {
    %c0_i32 = arith.constant 0 : i32
    %c0_i32_0 = arith.constant 0 : i32
    return %arg0, %c0_i32 : i32, i32
  }
}

</mosaic_0001>

<llo_original>
// kernel: tile.8
$region0: #{tile.8}
  #allocation0 [shape = 's32[1]{0}', space=sflag, size = 0x4, scoped, tag = 'scoped memory for tile.8']
  %s0 = inlined_call_operand.vmem [shape: f32[8], index: 0, kind: input, shape index: {}]
  %s1 = inlined_call_operand.vmem [shape: f32[16,8], index: 1, kind: output, shape index: {}]
  // Predicated region
  $region2: #{tile.8} parent=0 // pred_check
    _
  $region3: #{tile.8} parent=0 // pred_check_branch
    %3 = sbr.rel (0) target = $region5
  $region4: #{tile.8} parent=0 // pred_region
    _
  $region5: #{tile.8} parent=0 // pred_fallthru
    _
  %v4 = vld [vmem:[%s0] ss:$0 sm:$0xff]
  %5 = vst [vmem:[%s1] sm:$0xff] %v4
  %s6 = scalar_lea.vmem %s1, 8
  %7 = vst [vmem:[%s6] sm:$0xff] %v4

// kernel: tile.9
$region0: #{tile.9}
  %s0 = inlined_call_operand.vmem [shape: f32[16,8], index: 0, kind: input, shape index: {}]
  %s1 = inlined_call_operand.vmem [shape: f32[1,128], index: 1, kind: output, shape index: {}]
  $region1: #{tile.9} parent=0
    #allocation0 [shape = 'u8[4096]{0}', space=vmem, size = 0x1000, scoped, tag = 'scoped mem for output reshape']
    %v2 = vld [vmem:[%s0] sm:$0x1]
    %vm3 = vcmask 64512
    %4 = vst.msk [vmem:[#allocation0] sm:$0x1] %vm3, %v2
    %s5 = scalar_lea.vmem %s0, 15
    %v6 = vld [vmem:[%s5] sm:$0x1]
    %7 = vrot.lane.b32.xlu0 %v6, 120
    %v8 = vpop.permute.xlu0 %7
    %vm9 = vcmask 1048512
    %10 = vst.msk [vmem:[#allocation0] sm:$0x1] %vm9, %v8
    %s11 = scalar_lea.vmem %s0, 14
    %v12 = vld [vmem:[%s11] sm:$0x1]
    %13 = vrot.lane.b32.xlu0 %v12, 112
    %v14 = vpop.permute.xlu0 %13
    %vm15 = vcmask 982912
    %16 = vst.msk [vmem:[#allocation0] sm:$0x1] %vm15, %v14
    %s17 = scalar_lea.vmem %s0, 13
    %v18 = vld [vmem:[%s17] sm:$0x1]
    %19 = vrot.lane.b32.xlu0 %v18, 104
    %v20 = vpop.permute.xlu0 %19
    %vm21 = vcmask 917312
    %22 = vst.msk [vmem:[#allocation0] sm:$0x1] %vm21, %v20
    %s23 = scalar_lea.vmem %s0, 12
    %v24 = vld [vmem:[%s23] sm:$0x1]
    %25 = vrot.lane.b32.xlu0 %v24, 96
    %v26 = vpop.permute.xlu0 %25
    %vm27 = vcmask 851712
    %28 = vst.msk [vmem:[#allocation0] sm:$0x1] %vm27, %v26
    %s29 = scalar_lea.vmem %s0, 11
    %v30 = vld [vmem:[%s29] sm:$0x1]
    %31 = vrot.lane.b32.xlu0 %v30, 88
    %v32 = vpop.permute.xlu0 %31
    %vm33 = vcmask 786112
    %34 = vst.msk [vmem:[#allocation0] sm:$0x1] %vm33, %v32
    %s35 = scalar_lea.vmem %s0, 10
    %v36 = vld [vmem:[%s35] sm:$0x1]
    %37 = vrot.lane.b32.xlu0 %v36, 80
    %v38 = vpop.permute.xlu0 %37
    %vm39 = vcmask 720512
    %40 = vst.msk [vmem:[#allocation0] sm:$0x1] %vm39, %v38
    %s41 = scalar_lea.vmem %s0, 9
    %v42 = vld [vmem:[%s41] sm:$0x1]
    %43 = vrot.lane.b32.xlu0 %v42, 72
    %v44 = vpop.permute.xlu0 %43
    %vm45 = vcmask 654912
    %46 = vst.msk [vmem:[#allocation0] sm:$0x1] %vm45, %v44
    %s47 = scalar_lea.vmem %s0, 8
    %v48 = vld [vmem:[%s47] sm:$0x1]
    %49 = vrot.lane.b32.xlu0 %v48, 64
    %v50 = vpop.permute.xlu0 %49
    %vm51 = vcmask 589312
    %52 = vst.msk [vmem:[#allocation0] sm:$0x1] %vm51, %v50
    %s53 = scalar_lea.vmem %s0, 7
    %v54 = vld [vmem:[%s53] sm:$0x1]
    %55 = vrot.lane.b32.xlu0 %v54, 56
    %v56 = vpop.permute.xlu0 %55
    %vm57 = vcmask 523712
    %58 = vst.msk [vmem:[#allocation0] sm:$0x1] %vm57, %v56
    %s59 = scalar_lea.vmem %s0, 6
    %v60 = vld [vmem:[%s59] sm:$0x1]
    %61 = vrot.lane.b32.xlu0 %v60, 48
    %v62 = vpop.permute.xlu0 %61
    %vm63 = vcmask 458112
    %64 = vst.msk [vmem:[#allocation0] sm:$0x1] %vm63, %v62
    %s65 = scalar_lea.vmem %s0, 5
    %v66 = vld [vmem:[%s65] sm:$0x1]
    %67 = vrot.lane.b32.xlu0 %v66, 40
    %v68 = vpop.permute.xlu0 %67
    %vm69 = vcmask 392512
    %70 = vst.msk [vmem:[#allocation0] sm:$0x1] %vm69, %v68
    %s71 = scalar_lea.vmem %s0, 4
    %v72 = vld [vmem:[%s71] sm:$0x1]
    %73 = vrot.lane.b32.xlu0 %v72, 32
    %v74 = vpop.permute.xlu0 %73
    %vm75 = vcmask 326912
    %76 = vst.msk [vmem:[#allocation0] sm:$0x1] %vm75, %v74
    %s77 = scalar_lea.vmem %s0, 3
    %v78 = vld [vmem:[%s77] sm:$0x1]
    %79 = vrot.lane.b32.xlu0 %v78, 24
    %v80 = vpop.permute.xlu0 %79
    %vm81 = vcmask 261312
    %82 = vst.msk [vmem:[#allocation0] sm:$0x1] %vm81, %v80
    %s83 = scalar_lea.vmem %s0, 2
    %v84 = vld [vmem:[%s83] sm:$0x1]
    %85 = vrot.lane.b32.xlu0 %v84, 16
    %v86 = vpop.permute.xlu0 %85
    %vm87 = vcmask 195712
    %88 = vst.msk [vmem:[#allocation0] sm:$0x1] %vm87, %v86
    %s89 = scalar_lea.vmem %s0, 1
    %v90 = vld [vmem:[%s89] sm:$0x1]
    %91 = vrot.lane.b32.xlu0 %v90, 8
    %v92 = vpop.permute.xlu0 %91
    %vm93 = vcmask 130112
    %94 = vst.msk [vmem:[#allocation0] sm:$0x1] %vm93, %v92
    %s96 = sshllo.u32 0, 1
    %v98 = vld [vmem:[#allocation0] sm:%s96]
    %s99 = sshllo.u32 0, 1
    %100 = vst [vmem:[%s1] sm:%s99] %v98

// kernel: feature_extractor_forward.1
$region0: #{feature_extractor_forward.1}
  #allocation0 [shape = 'u32[]', space=smem, size = 0x4, offset = 0x4, fixed_abs, tag = 'smem constant byte address 0x4 - core index']
  #allocation1 [shape = 'u32[144,128]{1,0:T(1,128)}', space=vmem, size = 0x12000, scoped, tag = 'internal scratch']
  %s0 = inlined_call_operand.vmem [shape: bf16[8,16,256], index: 0, kind: input, shape index: {}]
  %s1 = inlined_call_operand.vmem [shape: bf16[256,128], index: 1, kind: input, shape index: {}]
  %s2 = inlined_call_operand.vmem [shape: f32[1,128], index: 2, kind: input, shape index: {}]
  %s3 = inlined_call_operand.vmem [shape: bf16[128,128], index: 3, kind: input, shape index: {}]
  %s4 = inlined_call_operand.vmem [shape: f32[8,128], index: 4, kind: output, shape index: {}]
  %s5 = sld [smem:[#allocation0]]
  $region26: #{feature_extractor_forward.1} parent=0
    _
  %s7 = ssub.s32 1, %s5
  %s8 = scalar_select 0, %s7, %s5
  // Predicated region
  $region2: #{feature_extractor_forward.1} parent=0 // pred_check
    _
  $region3: #{feature_extractor_forward.1} parent=0 // pred_check_branch
    %10 = sbr.rel (0) target = $region5
  $region4: #{feature_extractor_forward.1} parent=0 // pred_region
    _
  $region5: #{feature_extractor_forward.1} parent=0 // pred_fallthru
    _
  // Predicated region
  $region6: #{feature_extractor_forward.1} parent=0 // pred_check
    _
  $region7: #{feature_extractor_forward.1} parent=0 // pred_check_branch
    %12 = sbr.rel (0) target = $region9
  $region8: #{feature_extractor_forward.1} parent=0 // pred_region
    _
  $region9: #{feature_extractor_forward.1} parent=0 // pred_fallthru
    _
  // Predicated region
  $region10: #{feature_extractor_forward.1} parent=0 // pred_check
    _
  $region11: #{feature_extractor_forward.1} parent=0 // pred_check_branch
    %14 = sbr.rel (0) target = $region13
  $region12: #{feature_extractor_forward.1} parent=0 // pred_region
    _
  $region13: #{feature_extractor_forward.1} parent=0 // pred_fallthru
    _
  // Predicated region
  $region14: #{feature_extractor_forward.1} parent=0 // pred_check
    _
  $region15: #{feature_extractor_forward.1} parent=0 // pred_check_branch
    %16 = sbr.rel (0) target = $region17
  $region16: #{feature_extractor_forward.1} parent=0 // pred_region
    _
  $region17: #{feature_extractor_forward.1} parent=0 // pred_fallthru
    _
  %v18 = vld [vmem:[%s0] sm:$0xff]
  %v19 = vld [vmem:[%s0 + $0x8] sm:$0xff]
  %v20 = vld [vmem:[%s0 + $0x10] sm:$0xff]
  %v21 = vld [vmem:[%s0 + $0x18] sm:$0xff]
  %v22 = vld [vmem:[%s0 + $0x20] sm:$0xff]
  %v23 = vld [vmem:[%s0 + $0x28] sm:$0xff]
  %v24 = vld [vmem:[%s0 + $0x30] sm:$0xff]
  %v25 = vld [vmem:[%s0 + $0x38] sm:$0xff]
  %v26 = vld [vmem:[%s0 + $0x40] sm:$0xff]
  %v27 = vld [vmem:[%s0 + $0x48] sm:$0xff]
  %v28 = vld [vmem:[%s0 + $0x50] sm:$0xff]
  %v29 = vld [vmem:[%s0 + $0x58] sm:$0xff]
  %v30 = vld [vmem:[%s0 + $0x60] sm:$0xff]
  %v31 = vld [vmem:[%s0 + $0x68] sm:$0xff]
  %v32 = vld [vmem:[%s0 + $0x70] sm:$0xff]
  %v33 = vld [vmem:[%s0 + $0x78] sm:$0xff]
  %v34 = vld [vmem:[%s1] sm:$0xf]
  %v35 = vld [vmem:[%s1 + $0x4] sm:$0xf]
  %v36 = vld [vmem:[%s1 + $0x8] sm:$0xf]
  %v37 = vld [vmem:[%s1 + $0xc] sm:$0xf]
  %v38 = vld [vmem:[%s1 + $0x10] sm:$0xf]
  %v39 = vld [vmem:[%s1 + $0x14] sm:$0xf]
  %v40 = vld [vmem:[%s1 + $0x18] sm:$0xf]
  %v41 = vld [vmem:[%s1 + $0x1c] sm:$0xf]
  %v42 = vld [vmem:[%s1 + $0x20] sm:$0xf]
  %v43 = vld [vmem:[%s1 + $0x24] sm:$0xf]
  %v44 = vld [vmem:[%s1 + $0x28] sm:$0xf]
  %v45 = vld [vmem:[%s1 + $0x2c] sm:$0xf]
  %v46 = vld [vmem:[%s1 + $0x30] sm:$0xf]
  %v47 = vld [vmem:[%s1 + $0x34] sm:$0xf]
  %v48 = vld [vmem:[%s1 + $0x38] sm:$0xf]
  %v49 = vld [vmem:[%s1 + $0x3c] sm:$0xf]
  %v50 = vld [vmem:[%s1 + $0x40] sm:$0xf]
  %v51 = vld [vmem:[%s1 + $0x44] sm:$0xf]
  %v52 = vld [vmem:[%s1 + $0x48] sm:$0xf]
  %v53 = vld [vmem:[%s1 + $0x4c] sm:$0xf]
  %v54 = vld [vmem:[%s1 + $0x50] sm:$0xf]
  %v55 = vld [vmem:[%s1 + $0x54] sm:$0xf]
  %v56 = vld [vmem:[%s1 + $0x58] sm:$0xf]
  %v57 = vld [vmem:[%s1 + $0x5c] sm:$0xf]
  %v58 = vld [vmem:[%s1 + $0x60] sm:$0xf]
  %v59 = vld [vmem:[%s1 + $0x64] sm:$0xf]
  %v60 = vld [vmem:[%s1 + $0x68] sm:$0xf]
  %v61 = vld [vmem:[%s1 + $0x6c] sm:$0xf]
  %v62 = vld [vmem:[%s1 + $0x70] sm:$0xf]
  %v63 = vld [vmem:[%s1 + $0x74] sm:$0xf]
  %v64 = vld [vmem:[%s1 + $0x78] sm:$0xf]
  %v65 = vld [vmem:[%s1 + $0x7c] sm:$0xf]
  %v66 = vld [vmem:[%s2] sm:$0x1]
  %v68 = vlaneseq
  %v69 = vshrl.u32 %v68, 7
  %v70 = vsub.s32 0, %v69
  %v71 = vrot.slane %v66, %v70
  %v89 = vunpack.c.l.b16 %v18
  %v90 = vunpack.c.h.b16 %v18
  %v91 = vunpack.c.l.b16 %v19
  %v92 = vunpack.c.h.b16 %v19
  %v93 = vunpack.c.l.b16 %v20
  %v94 = vunpack.c.h.b16 %v20
  %v95 = vunpack.c.l.b16 %v21
  %v96 = vunpack.c.h.b16 %v21
  %v97 = vunpack.c.l.b16 %v22
  %v98 = vunpack.c.h.b16 %v22
  %v99 = vunpack.c.l.b16 %v23
  %v100 = vunpack.c.h.b16 %v23
  %v101 = vunpack.c.l.b16 %v24
  %v102 = vunpack.c.h.b16 %v24
  %v103 = vunpack.c.l.b16 %v25
  %v104 = vunpack.c.h.b16 %v25
  %v105 = vunpack.c.l.b16 %v26
  %v106 = vunpack.c.h.b16 %v26
  %v107 = vunpack.c.l.b16 %v27
  %v108 = vunpack.c.h.b16 %v27
  %v109 = vunpack.c.l.b16 %v28
  %v110 = vunpack.c.h.b16 %v28
  %v111 = vunpack.c.l.b16 %v29
  %v112 = vunpack.c.h.b16 %v29
  %v113 = vunpack.c.l.b16 %v30
  %v114 = vunpack.c.h.b16 %v30
  %v115 = vunpack.c.l.b16 %v31
  %v116 = vunpack.c.h.b16 %v31
  %v117 = vunpack.c.l.b16 %v32
  %v118 = vunpack.c.h.b16 %v32
  %v119 = vunpack.c.l.b16 %v33
  %v120 = vunpack.c.h.b16 %v33
  %v121 = vpack.c.b16 %v91, %v89
  %v122 = vpack.c.b16 %v92, %v90
  %v123 = vpack.c.b16 %v95, %v93
  %v124 = vpack.c.b16 %v96, %v94
  %v125 = vpack.c.b16 %v99, %v97
  %v126 = vpack.c.b16 %v100, %v98
  %v127 = vpack.c.b16 %v103, %v101
  %v128 = vpack.c.b16 %v104, %v102
  %v129 = vpack.c.b16 %v107, %v105
  %v130 = vpack.c.b16 %v108, %v106
  %v131 = vpack.c.b16 %v111, %v109
  %v132 = vpack.c.b16 %v112, %v110
  %v133 = vpack.c.b16 %v115, %v113
  %v134 = vpack.c.b16 %v116, %v114
  %v135 = vpack.c.b16 %v119, %v117
  %v136 = vpack.c.b16 %v120, %v118
  %v185 = vunpack.c.l.b16 %v34
  %v186 = vunpack.c.l.b16 %v35
  %v187 = vunpack.c.l.b16 %v36
  %v188 = vunpack.c.l.b16 %v37
  %v189 = vunpack.c.l.b16 %v38
  %v190 = vunpack.c.l.b16 %v39
  %v191 = vunpack.c.l.b16 %v40
  %v192 = vunpack.c.l.b16 %v41
  %v193 = vunpack.c.l.b16 %v42
  %v194 = vunpack.c.l.b16 %v43
  %v195 = vunpack.c.l.b16 %v44
  %v196 = vunpack.c.l.b16 %v45
  %v197 = vunpack.c.l.b16 %v46
  %v198 = vunpack.c.l.b16 %v47
  %v199 = vunpack.c.l.b16 %v48
  %v200 = vunpack.c.l.b16 %v49
  %v201 = vunpack.c.l.b16 %v50
  %v202 = vunpack.c.l.b16 %v51
  %v203 = vunpack.c.l.b16 %v52
  %v204 = vunpack.c.l.b16 %v53
  %v205 = vunpack.c.l.b16 %v54
  %v206 = vunpack.c.l.b16 %v55
  %v207 = vunpack.c.l.b16 %v56
  %v208 = vunpack.c.l.b16 %v57
  %v209 = vunpack.c.l.b16 %v58
  %v210 = vunpack.c.l.b16 %v59
  %v211 = vunpack.c.l.b16 %v60
  %v212 = vunpack.c.l.b16 %v61
  %v213 = vunpack.c.l.b16 %v62
  %v214 = vunpack.c.l.b16 %v63
  %v215 = vunpack.c.l.b16 %v64
  %v216 = vunpack.c.l.b16 %v65
  %v217 = vpack.c.b16 %v186, %v185
  %v218 = vpack.c.b16 %v188, %v187
  %v219 = vpack.c.b16 %v190, %v189
  %v220 = vpack.c.b16 %v192, %v191
  %v221 = vpack.c.b16 %v194, %v193
  %v222 = vpack.c.b16 %v196, %v195
  %v223 = vpack.c.b16 %v198, %v197
  %v224 = vpack.c.b16 %v200, %v199
  %v225 = vpack.c.b16 %v202, %v201
  %v226 = vpack.c.b16 %v204, %v203
  %v227 = vpack.c.b16 %v206, %v205
  %v228 = vpack.c.b16 %v208, %v207
  %v229 = vpack.c.b16 %v210, %v209
  %v230 = vpack.c.b16 %v212, %v211
  %v231 = vpack.c.b16 %v214, %v213
  %v232 = vpack.c.b16 %v216, %v215
  %249 = vmatprep.subr.bf16.mxu0 0
  %250 = vmatpush1.bf16.msra.mxu0 %v217
  %251 = vmatprep.subr.bf16.mxu0 0
  %252 = vmatpush1.bf16.msra.mxu0 %v218
  %253 = vmatprep.subr.bf16.mxu0 0
  %254 = vmatpush1.bf16.msra.mxu0 %v219
  %255 = vmatprep.subr.bf16.mxu0 0
  %256 = vmatpush1.bf16.msra.mxu0 %v220
  %257 = vmatprep.subr.bf16.mxu0 0
  %258 = vmatpush1.bf16.msra.mxu0 %v221
  %259 = vmatprep.subr.bf16.mxu0 0
  %260 = vmatpush1.bf16.msra.mxu0 %v222
  %261 = vmatprep.subr.bf16.mxu0 0
  %262 = vmatpush1.bf16.msra.mxu0 %v223
  %263 = vmatprep.subr.bf16.mxu0 0
  %264 = vmatpush1.bf16.msra.mxu0 %v224
  %265 = vmatprep.subr.bf16.mxu0 0
  %266 = vmatpush1.bf16.msra.mxu0 %v225
  %267 = vmatprep.subr.bf16.mxu0 0
  %268 = vmatpush1.bf16.msra.mxu0 %v226
  %269 = vmatprep.subr.bf16.mxu0 0
  %270 = vmatpush1.bf16.msra.mxu0 %v227
  %271 = vmatprep.subr.bf16.mxu0 0
  %272 = vmatpush1.bf16.msra.mxu0 %v228
  %273 = vmatprep.subr.bf16.mxu0 0
  %274 = vmatpush1.bf16.msra.mxu0 %v229
  %275 = vmatprep.subr.bf16.mxu0 0
  %276 = vmatpush1.bf16.msra.mxu0 %v230
  %277 = vmatprep.subr.bf16.mxu0 0
  %278 = vmatpush1.bf16.msra.mxu0 %v231
  %279 = vmatprep.subr.bf16.mxu0 0
  %280 = vmatpush1.bf16.msra.mxu0 %v232
  %281 = vmatprep.mubr.bf16.mxu0 %v122
  %282 = vmatmul.mubr.bf16.gmra.mrb[0].mxu0 %v121
  %v283 = vpop.f32.mrb[0].mxu0
  %v284 = vadd.f32 %v71, %v283
  %v285 = vpop.f32.mrb[0].mxu0
  %v286 = vpop.f32.mrb[0].mxu0
  %v287 = vadd.f32 %v71, %v286
  %v288 = vpop.f32.mrb[0].mxu0
  %289 = vmatprep.mubr.bf16.mxu0 %v124
  %290 = vmatmul.mubr.bf16.gmra.mrb[0].mxu0 %v123
  %v291 = vpop.f32.mrb[0].mxu0
  %v292 = vadd.f32 %v71, %v291
  %v293 = vpop.f32.mrb[0].mxu0
  %v294 = vpop.f32.mrb[0].mxu0
  %v295 = vadd.f32 %v71, %v294
  %v296 = vpop.f32.mrb[0].mxu0
  %297 = vmatprep.mubr.bf16.mxu0 %v126
  %298 = vmatmul.mubr.bf16.gmra.mrb[0].mxu0 %v125
  %v299 = vpop.f32.mrb[0].mxu0
  %v300 = vadd.f32 %v71, %v299
  %v301 = vpop.f32.mrb[0].mxu0
  %v302 = vpop.f32.mrb[0].mxu0
  %v303 = vadd.f32 %v71, %v302
  %v304 = vpop.f32.mrb[0].mxu0
  %305 = vmatprep.mubr.bf16.mxu0 %v128
  %306 = vmatmul.mubr.bf16.gmra.mrb[0].mxu0 %v127
  %v307 = vpop.f32.mrb[0].mxu0
  %v308 = vadd.f32 %v71, %v307
  %v309 = vpop.f32.mrb[0].mxu0
  %v310 = vpop.f32.mrb[0].mxu0
  %v311 = vadd.f32 %v71, %v310
  %v312 = vpop.f32.mrb[0].mxu0
  %313 = vmatprep.mubr.bf16.mxu0 %v130
  %314 = vmatmul.mubr.bf16.gmra.mrb[0].mxu0 %v129
  %v315 = vpop.f32.mrb[0].mxu0
  %v316 = vadd.f32 %v71, %v315
  %v317 = vpop.f32.mrb[0].mxu0
  %v318 = vpop.f32.mrb[0].mxu0
  %v319 = vadd.f32 %v71, %v318
  %v320 = vpop.f32.mrb[0].mxu0
  %321 = vmatprep.mubr.bf16.mxu0 %v132
  %322 = vmatmul.mubr.bf16.gmra.mrb[0].mxu0 %v131
  %v323 = vpop.f32.mrb[0].mxu0
  %v324 = vadd.f32 %v71, %v323
  %v325 = vpop.f32.mrb[0].mxu0
  %v326 = vpop.f32.mrb[0].mxu0
  %v327 = vadd.f32 %v71, %v326
  %v328 = vpop.f32.mrb[0].mxu0
  %329 = vmatprep.mubr.bf16.mxu0 %v134
  %330 = vmatmul.mubr.bf16.gmra.mrb[0].mxu0 %v133
  %v331 = vpop.f32.mrb[0].mxu0
  %v332 = vadd.f32 %v71, %v331
  %v333 = vpop.f32.mrb[0].mxu0
  %v334 = vpop.f32.mrb[0].mxu0
  %v335 = vadd.f32 %v71, %v334
  %v336 = vpop.f32.mrb[0].mxu0
  %337 = vmatprep.mubr.bf16.mxu0 %v136
  %338 = vmatmul.mubr.bf16.gmra.mrb[0].mxu0 %v135
  %v339 = vpop.f32.mrb[0].mxu0
  %v340 = vadd.f32 %v71, %v339
  %v341 = vpop.f32.mrb[0].mxu0
  %v342 = vpop.f32.mrb[0].mxu0
  %v343 = vadd.f32 %v71, %v342
  %v344 = vpop.f32.mrb[0].mxu0
  %345 = vdwg.mxu0
  %v346 = vmax.f32 %v284, 0.0
  %v347 = vmax.f32 %v287, 0.0
  %v348 = vmax.f32 %v292, 0.0
  %v349 = vmax.f32 %v295, 0.0
  %v350 = vmax.f32 %v300, 0.0
  %v351 = vmax.f32 %v303, 0.0
  %v352 = vmax.f32 %v308, 0.0
  %v353 = vmax.f32 %v311, 0.0
  %v354 = vmax.f32 %v316, 0.0
  %v355 = vmax.f32 %v319, 0.0
  %v356 = vmax.f32 %v324, 0.0
  %v357 = vmax.f32 %v327, 0.0
  %v358 = vmax.f32 %v332, 0.0
  %v359 = vmax.f32 %v335, 0.0
  %v360 = vmax.f32 %v340, 0.0
  %v361 = vmax.f32 %v343, 0.0
  %v362 = vadd.f32 %v346, %v347
  %v363 = vrot.slane %v362, 4
  %v364 = vadd.f32 %v362, %v363
  %v365 = vrot.slane %v364, 2
  %v366 = vadd.f32 %v364, %v365
  %v367 = vrot.slane %v366, 1
  %v368 = vadd.f32 %v366, %v367
  %v369 = vadd.f32 %v348, %v349
  %v370 = vrot.slane %v369, 4
  %v371 = vadd.f32 %v369, %v370
  %v372 = vrot.slane %v371, 2
  %v373 = vadd.f32 %v371, %v372
  %v374 = vrot.slane %v373, 1
  %v375 = vadd.f32 %v373, %v374
  %v376 = vadd.f32 %v350, %v351
  %v377 = vrot.slane %v376, 4
  %v378 = vadd.f32 %v376, %v377
  %v379 = vrot.slane %v378, 2
  %v380 = vadd.f32 %v378, %v379
  %v381 = vrot.slane %v380, 1
  %v382 = vadd.f32 %v380, %v381
  %v383 = vadd.f32 %v352, %v353
  %v384 = vrot.slane %v383, 4
  %v385 = vadd.f32 %v383, %v384
  %v386 = vrot.slane %v385, 2
  %v387 = vadd.f32 %v385, %v386
  %v388 = vrot.slane %v387, 1
  %v389 = vadd.f32 %v387, %v388
  %v390 = vadd.f32 %v354, %v355
  %v391 = vrot.slane %v390, 4
  %v392 = vadd.f32 %v390, %v391
  %v393 = vrot.slane %v392, 2
  %v394 = vadd.f32 %v392, %v393
  %v395 = vrot.slane %v394, 1
  %v396 = vadd.f32 %v394, %v395
  %v397 = vadd.f32 %v356, %v357
  %v398 = vrot.slane %v397, 4
  %v399 = vadd.f32 %v397, %v398
  %v400 = vrot.slane %v399, 2
  %v401 = vadd.f32 %v399, %v400
  %v402 = vrot.slane %v401, 1
  %v403 = vadd.f32 %v401, %v402
  %v404 = vadd.f32 %v358, %v359
  %v405 = vrot.slane %v404, 4
  %v406 = vadd.f32 %v404, %v405
  %v407 = vrot.slane %v406, 2
  %v408 = vadd.f32 %v406, %v407
  %v409 = vrot.slane %v408, 1
  %v410 = vadd.f32 %v408, %v409
  %v411 = vadd.f32 %v360, %v361
  %v412 = vrot.slane %v411, 4
  %v413 = vadd.f32 %v411, %v412
  %v414 = vrot.slane %v413, 2
  %v415 = vadd.f32 %v413, %v414
  %v416 = vrot.slane %v415, 1
  %v417 = vadd.f32 %v415, %v416
  %v418 = vpack.c.bf16 %v368, %v368
  %v419 = vpack.c.bf16 %v375, %v375
  %v420 = vpack.c.bf16 %v382, %v382
  %v421 = vpack.c.bf16 %v389, %v389
  %v422 = vpack.c.bf16 %v396, %v396
  %v423 = vpack.c.bf16 %v403, %v403
  %v424 = vpack.c.bf16 %v410, %v410
  %v425 = vpack.c.bf16 %v417, %v417
  %v426 = vld [vmem:[%s3] sm:$0xf]
  %v427 = vld [vmem:[%s3 + $0x4] sm:$0xf]
  %v428 = vld [vmem:[%s3 + $0x8] sm:$0xf]
  %v429 = vld [vmem:[%s3 + $0xc] sm:$0xf]
  %v430 = vld [vmem:[%s3 + $0x10] sm:$0xf]
  %v431 = vld [vmem:[%s3 + $0x14] sm:$0xf]
  %v432 = vld [vmem:[%s3 + $0x18] sm:$0xf]
  %v433 = vld [vmem:[%s3 + $0x1c] sm:$0xf]
  %v434 = vld [vmem:[%s3 + $0x20] sm:$0xf]
  %v435 = vld [vmem:[%s3 + $0x24] sm:$0xf]
  %v436 = vld [vmem:[%s3 + $0x28] sm:$0xf]
  %v437 = vld [vmem:[%s3 + $0x2c] sm:$0xf]
  %v438 = vld [vmem:[%s3 + $0x30] sm:$0xf]
  %v439 = vld [vmem:[%s3 + $0x34] sm:$0xf]
  %v440 = vld [vmem:[%s3 + $0x38] sm:$0xf]
  %v441 = vld [vmem:[%s3 + $0x3c] sm:$0xf]
  %v450 = vunpack.c.l.b16 %v418
  %v451 = vunpack.c.l.b16 %v419
  %v452 = vunpack.c.l.b16 %v420
  %v453 = vunpack.c.l.b16 %v421
  %v454 = vunpack.c.l.b16 %v422
  %v455 = vunpack.c.l.b16 %v423
  %v456 = vunpack.c.l.b16 %v424
  %v457 = vunpack.c.l.b16 %v425
  %vm458 = vcmask 1041409
  %v459 = vsel %vm458, %v451, %v450
  %vm460 = vcmask 1042434
  %v461 = vsel %vm460, %v452, %v459
  %vm462 = vcmask 1043459
  %v463 = vsel %vm462, %v453, %v461
  %vm464 = vcmask 1044484
  %v465 = vsel %vm464, %v454, %v463
  %vm466 = vcmask 1045509
  %v467 = vsel %vm466, %v455, %v465
  %vm468 = vcmask 1046534
  %v469 = vsel %vm468, %v456, %v467
  %vm470 = vcmask 1047559
  %v471 = vsel %vm470, %v457, %v469
  %v472 = vpack.c.b16 %v471, %v471
  %v490 = vunpack.c.l.b16 %v426
  %v491 = vunpack.c.l.b16 %v427
  %v492 = vunpack.c.l.b16 %v428
  %v493 = vunpack.c.l.b16 %v429
  %v494 = vunpack.c.l.b16 %v430
  %v495 = vunpack.c.l.b16 %v431
  %v496 = vunpack.c.l.b16 %v432
  %v497 = vunpack.c.l.b16 %v433
  %v498 = vunpack.c.l.b16 %v434
  %v499 = vunpack.c.l.b16 %v435
  %v500 = vunpack.c.l.b16 %v436
  %v501 = vunpack.c.l.b16 %v437
  %v502 = vunpack.c.l.b16 %v438
  %v503 = vunpack.c.l.b16 %v439
  %v504 = vunpack.c.l.b16 %v440
  %v505 = vunpack.c.l.b16 %v441
  %v506 = vpack.c.b16 %v491, %v490
  %v507 = vpack.c.b16 %v493, %v492
  %v508 = vpack.c.b16 %v495, %v494
  %v509 = vpack.c.b16 %v497, %v496
  %v510 = vpack.c.b16 %v499, %v498
  %v511 = vpack.c.b16 %v501, %v500
  %v512 = vpack.c.b16 %v503, %v502
  %v513 = vpack.c.b16 %v505, %v504
  %522 = vmatprep.subr.bf16.mxu0 0
  %523 = vmatpush1.bf16.msra.mxu0 %v506
  %524 = vmatprep.subr.bf16.mxu0 0
  %525 = vmatpush1.bf16.msra.mxu0 %v507
  %526 = vmatprep.subr.bf16.mxu0 0
  %527 = vmatpush1.bf16.msra.mxu0 %v508
  %528 = vmatprep.subr.bf16.mxu0 0
  %529 = vmatpush1.bf16.msra.mxu0 %v509
  %530 = vmatprep.subr.bf16.mxu0 0
  %531 = vmatpush1.bf16.msra.mxu0 %v510
  %532 = vmatprep.subr.bf16.mxu0 0
  %533 = vmatpush1.bf16.msra.mxu0 %v511
  %534 = vmatprep.subr.bf16.mxu0 0
  %535 = vmatpush1.bf16.msra.mxu0 %v512
  %536 = vmatprep.subr.bf16.mxu0 0
  %537 = vmatpush1.bf16.msra.mxu0 %v513
  %538 = vmatprep.subr.bf16.mxu0 0
  %539 = vmatpush1.bf16.msra.mxu0 0
  %540 = vmatprep.subr.bf16.mxu0 0
  %541 = vmatpush1.bf16.msra.mxu0 0
  %542 = vmatprep.subr.bf16.mxu0 0
  %543 = vmatpush1.bf16.msra.mxu0 0
  %544 = vmatprep.subr.bf16.mxu0 0
  %545 = vmatpush1.bf16.msra.mxu0 0
  %546 = vmatprep.subr.bf16.mxu0 0
  %547 = vmatpush1.bf16.msra.mxu0 0
  %548 = vmatprep.subr.bf16.mxu0 0
  %549 = vmatpush1.bf16.msra.mxu0 0
  %550 = vmatprep.subr.bf16.mxu0 0
  %551 = vmatpush1.bf16.msra.mxu0 0
  %552 = vmatprep.subr.bf16.mxu0 0
  %553 = vmatpush1.bf16.msra.mxu0 0
  %554 = vmatprep.mubr.bf16.mxu0 0
  %555 = vmatmul.mubr.bf16.gmra.mrb[0].mxu0 %v472
  %v556 = vpop.f32.mrb[0].mxu0
  %v557 = vadd.f32 0.0, %v556
  %v558 = vpop.f32.mrb[0].mxu0
  %v559 = vpop.f32.mrb[0].mxu0
  %v560 = vpop.f32.mrb[0].mxu0
  %561 = vdwg.mxu0
  %562 = vst [vmem:[%s4] sm:$0xff] %v557
  // Predicated region
  $region18: #{feature_extractor_forward.1} parent=0 // pred_check
    _
  $region19: #{feature_extractor_forward.1} parent=0 // pred_check_branch
    %564 = sbr.rel (0) target = $region21
  $region20: #{feature_extractor_forward.1} parent=0 // pred_region
    _
  $region21: #{feature_extractor_forward.1} parent=0 // pred_fallthru
    _
  // Predicated region
  $region22: #{feature_extractor_forward.1} parent=0 // pred_check
    _
  $region23: #{feature_extractor_forward.1} parent=0 // pred_check_branch
    %566 = sbr.rel (0) target = $region25
  $region24: #{feature_extractor_forward.1} parent=0 // pred_region
    _
  $region25: #{feature_extractor_forward.1} parent=0 // pred_fallthru
    _

</llo_original>
